<compile_context>
chip_gen: v5e
topology: v5e:2x2
jax: 0.10.0
libtpu: 0.0.40
codegen_flags: <defaults>
</compile_context>

<pallas_src>
import functools
import math

import jax
import jax.numpy as jnp
from jax.experimental import pallas as pl
from jax.experimental.pallas import tpu as pltpu

LANE = 128  # TPU lane width; channel axes are padded to a multiple of this.


# ----------------------------------------------------------------------------
# Parameter-list generation (same arithmetic as the PyTorch reference, no prints)
# ----------------------------------------------------------------------------
def get_prime_numbers_in_range(start, end):
    primes = []
    for val in range(start, end + 1):
        is_prime = True
        for n in range(2, val):
            if val % n == 0:
                is_prime = False
                break
        if is_prime:
            primes.append(val)   # note: reference treats 1 as prime; kept as-is
    return primes


def get_out_channel_number(param_budget, in_channel, prime_list):
    return int(param_budget / (in_channel * sum(prime_list)))


def generate_layer_parameter_list(start, end, param_budgets, in_channel=1):
    prime_list = get_prime_numbers_in_range(start, end)
    input_in_channel = in_channel
    layer_parameter_list = []
    for budget in param_budgets:
        out_channel = get_out_channel_number(budget, in_channel, prime_list)
        layer_parameter_list.append([(in_channel, out_channel, p) for p in prime_list])
        in_channel = len(prime_list) * out_channel
    first_out_channel = len(prime_list) * get_out_channel_number(
        param_budgets[0], input_in_channel, prime_list)
    layer_parameter_list.append([(in_channel, first_out_channel, start),
                                 (in_channel, first_out_channel, start + 1)])
    return layer_parameter_list


def calculate_mask_index(kernel_len, largest_kernel_len):
    right = math.ceil((largest_kernel_len - 1) / 2) - math.ceil((kernel_len - 1) / 2)
    left = largest_kernel_len - kernel_len - right
    return left, left + kernel_len


def _round_up(n, m):
    return ((n + m - 1) // m) * m


# ----------------------------------------------------------------------------
# Deterministic parameter init (replaces torch Conv1d init).  Each per-prime
# kernel is zero-embedded into the "big" kernel exactly like creak_layer_mask,
# then converted to the tap-PACKED im2col layout used by the kernel:
#   row index = group*128 + (tap_in_group)*Cin + cin  ->  column = cout,
# stored bf16.  The conv bias is dropped: with BatchNorm batch statistics it
# cancels exactly.
# ----------------------------------------------------------------------------
def init_layer_params(key, layer_parameters):
    largest_k = layer_parameters[-1][-1]
    cin_real = layer_parameters[0][0]
    blocks = []
    for (cin, cout, k) in layer_parameters:
        key, kw = jax.random.split(key)
        bound = 1.0 / math.sqrt(cin * k)
        w = jax.random.uniform(kw, (cout, cin, k), jnp.float32, -bound, bound)
        ind_l, ind_r = calculate_mask_index(k, largest_k)
        big = jnp.zeros((cout, cin, largest_k), jnp.float32)
        big = big.at[:, :, ind_l:ind_r].set(w)        # weight * mask is implicit
        blocks.append(big)
    W = jnp.concatenate(blocks, axis=0)               # (Cout_total, Cin, Kmax)
    cout_real = W.shape[0]
    cout_pad = _round_up(cout_real, LANE)
    K = largest_k
    w_t = jnp.transpose(W, (2, 1, 0))                 # (K, Cin, Cout) tap-major

    if cin_real <= LANE:
        # Pack several taps' real channels into one 128-lane group.
        tpg = LANE // cin_real
        n_groups = -(-K // tpg)
        w_pack = jnp.zeros((n_groups, LANE, cout_pad), jnp.float32)
        for k in range(K):
            g, j = divmod(k, tpg)
            w_pack = w_pack.at[g, j * cin_real:(j + 1) * cin_real,
                               :cout_real].set(w_t[k])
        w_im = w_pack.reshape(n_groups * LANE, cout_pad)
    else:
        # Wide-channel fallback: full 128-lane tiles per tap (no packing).
        tpg = 1
        cin_pad = _round_up(cin_real, LANE)
        w_pack = jnp.zeros((K, cin_pad, cout_pad), jnp.float32)
        w_pack = w_pack.at[:, :cin_real, :cout_real].set(w_t)
        w_im = w_pack.reshape(K * cin_pad, cout_pad)

    meta = dict(K=K, pad_left=(K - 1) // 2, cin=cin_real, tpg=tpg)
    return key, w_im.astype(jnp.bfloat16), meta, cout_real, cout_pad


# ----------------------------------------------------------------------------
# Fused Pallas kernel: all layers + global average pool, everything VMEM-resident
# ----------------------------------------------------------------------------
def _os_cnn_fused_kernel(x_ref, *refs, metas, B, L, eps):
    n_layers = len(metas)
    w_refs = refs[:n_layers]
    out_ref = refs[n_layers]
    BL = B * L

    h = x_ref[...]                                    # (B*L, Cpad) f32, lane-dense

    # Per-row time index t = row % L, built IN-KERNEL from an iota (no captured
    # constants), and boundary masks cached per shift value across all layers.
    t_idx = jax.lax.broadcasted_iota(jnp.int32, (BL, 1), 0) % L
    mask_cache = {}

    def boundary_mask(s):
        if s not in mask_cache:
            ts = t_idx + s
            mask_cache[s] = ((ts >= 0) & (ts < L)).astype(jnp.float32)
        return mask_cache[s]

    for li, meta in enumerate(metas):
        K, pad_left, cin, tpg = meta["K"], meta["pad_left"], meta["cin"], meta["tpg"]

        # Time-shifted taps: sublane roll (XLU slot) + static boundary mask that
        # zeroes rows wrapped across the zero-padding / batch boundary.
        taps = []
        for k in range(K):
            s = k - pad_left                          # tap k reads x[t + s]
            if s == 0:
                taps.append(h)
            else:
                rolled = pltpu.roll(h, shift=(-s) % BL, axis=0)
                taps.append(rolled * boundary_mask(s))

        # Pack the taps' real channels into 128-lane groups via lane rolls
        # (padded lanes are exactly zero, so a plain add assembles the group).
        if cin <= LANE:
            groups = []
            n_groups = -(-K // tpg)
            for g in range(n_groups):
                acc_g = None
                for j in range(tpg):
                    k = g * tpg + j
                    if k >= K:
                        break
                    tap = taps[k]
                    if j > 0:
                        tap = pltpu.roll(tap, shift=j * cin, axis=1)
                    acc_g = tap if acc_g is None else acc_g + tap
                groups.append(acc_g)
            cols = groups[0] if len(groups) == 1 else jnp.concatenate(groups, axis=1)
        else:
            cols = taps[0] if K == 1 else jnp.concatenate(taps, axis=1)

        # Single MXU matmul per layer: bf16 operands, f32 accumulation.
        acc = jnp.dot(cols.astype(jnp.bfloat16), w_refs[li][...],
                      preferred_element_type=jnp.float32)

        # BatchNorm1d, training-mode batch stats (biased var), gamma=1, beta=0.
        # (Conv bias omitted: it cancels exactly in acc - mean.)
        mean = jnp.mean(acc, axis=0, keepdims=True)
        var = jnp.mean(jnp.square(acc - mean), axis=0, keepdims=True)
        h = jnp.maximum((acc - mean) * jax.lax.rsqrt(var + eps), 0.0)

    # AdaptiveAvgPool1d(1) + squeeze(-1): mean over the length axis.
    out_ref[...] = jnp.sum(h.reshape(B, L, h.shape[-1]), axis=1) * (1.0 / L)


# ----------------------------------------------------------------------------
# OS_CNN model
# ----------------------------------------------------------------------------
class OSCNNPallas:
    def __init__(self, layer_parameter_list, n_class, few_shot=True,
                 key=jax.random.PRNGKey(0)):
        self.few_shot = few_shot
        cin0 = layer_parameter_list[0][0][0]
        cin0_pad = _round_up(cin0, LANE)

        weights, metas = [], []
        cout_real = cout_pad = None
        for lp in layer_parameter_list:
            key, w_im, meta, cout_real, cout_pad = init_layer_params(key, lp)
            weights.append(w_im)
            metas.append(meta)
        self.weights = tuple(weights)
        self.metas = tuple(metas)
        self.cin0_pad = cin0_pad
        self.cout_last = cout_real
        self.cout_pad_last = cout_pad

        out_ch = sum(t[1] for t in layer_parameter_list[-1])
        key, kw, kb = jax.random.split(key, 3)
        bound = 1.0 / math.sqrt(out_ch)
        # hidden Linear only used when few_shot=False (plain-JAX glue, as in ref).
        hidden_w = jax.random.uniform(kw, (n_class, out_ch), jnp.float32, -bound, bound)
        hidden_b = jax.random.uniform(kb, (n_class,), jnp.float32, -bound, bound)
        self.hidden_w, self.hidden_b = hidden_w, hidden_b

        metas_t = self.metas
        cout_last = self.cout_last
        cout_pad_last = self.cout_pad_last
        few = self.few_shot

        def _fwd(x_ncl, weights):
            # PyTorch layout (B, C, L) -> channels-last, flattened to (B*L, C),
            # channel axis padded to 128 lanes (all done in the jitted wrapper).
            x = jnp.transpose(x_ncl.astype(jnp.float32), (0, 2, 1))
            B, L, cin = x.shape
            x2 = x.reshape(B * L, cin)
            x2 = jnp.pad(x2, ((0, 0), (0, cin0_pad - cin)))
            kernel = functools.partial(_os_cnn_fused_kernel, metas=metas_t,
                                       B=B, L=L, eps=1e-5)
            out_pad = pl.pallas_call(
                kernel,
                out_shape=jax.ShapeDtypeStruct((B, cout_pad_last), jnp.float32),
                grid=(1,),
                in_specs=[pl.BlockSpec((B * L, cin0_pad), lambda i: (0, 0))]
                         + [pl.BlockSpec(w.shape, lambda i: (0, 0)) for w in weights],
                out_specs=pl.BlockSpec((B, cout_pad_last), lambda i: (0, 0)),
                compiler_params=pltpu.CompilerParams(
                    dimension_semantics=("arbitrary",)),
            )(x2, *weights)
            feats = out_pad[:, :cout_last]           # drop lane padding
            if not few:
                feats = feats @ hidden_w.T + hidden_b
            return feats

        self._fwd = jax.jit(_fwd)

    def __call__(self, x_ncl):
        return self._fwd(x_ncl, self.weights)


if __name__ == "__main__":
    # Small config built with the same generator arithmetic as the reference
    # (primes in [1,7] = [1,2,3,5,7]):
    #   layer 0: (16, 8, p)               -> 40 channels out, Kmax=7
    #   layer 1: (40, 4, p)               -> 20 channels out, Kmax=7
    #   layer 2: (20, 40, 1), (20, 40, 2) -> 80 channels out, Kmax=2
    layer_parameter_list = generate_layer_parameter_list(
        1, 7, [8 * 16 * 18, 4 * 40 * 18], in_channel=16)

    key = jax.random.PRNGKey(0)
    kx, kp = jax.random.split(key)
    x = jax.random.normal(kx, (2, 16, 16), jnp.float32)   # (batch=2, channels=16, length=16)

    model = OSCNNPallas(layer_parameter_list, n_class=5, few_shot=True, key=kp)
    out = model(x)
    jax.block_until_ready(out)
    assert out.shape == (2, 80) and out.dtype == jnp.float32
    assert bool(jnp.all(jnp.isfinite(out)))
    print("KERNEL_OK")
</pallas_src>

<mosaic_0001>
module attributes {stable_mosaic.version = 11 : i64} {
  func.func @_os_cnn_fused_kernel(%arg0: i32, %arg1: memref<32x128xf32, #tpu.memory_space<vmem>>, %arg2: memref<128x128xbf16, #tpu.memory_space<vmem>>, %arg3: memref<384x128xbf16, #tpu.memory_space<vmem>>, %arg4: memref<128x128xbf16, #tpu.memory_space<vmem>>, %arg5: memref<2x128xf32, #tpu.memory_space<vmem>>) attributes {dimension_semantics = [#tpu.dimension_semantics<arbitrary>], iteration_bounds = array<i64: 1>, scalar_prefetch = 0 : i64, scratch_operands = 0 : i64, tpu.core_type = #tpu.core_type<tc>, window_params = [{pipeline_mode = #tpu.pipeline_mode<synchronous>, transform_indices = @transform_0, window_bounds = array<i64: 32, 128>}, {pipeline_mode = #tpu.pipeline_mode<synchronous>, transform_indices = @transform_1, window_bounds = array<i64: 128, 128>}, {pipeline_mode = #tpu.pipeline_mode<synchronous>, transform_indices = @transform_2, window_bounds = array<i64: 384, 128>}, {pipeline_mode = #tpu.pipeline_mode<synchronous>, transform_indices = @transform_3, window_bounds = array<i64: 128, 128>}, {pipeline_mode = #tpu.pipeline_mode<synchronous>, transform_indices = @transform_4, window_bounds = array<i64: 2, 128>}]} {
    %c0 = arith.constant 0 : index
    %c0_0 = arith.constant 0 : index
    %0 = vector.load %arg1[%c0, %c0_0] : memref<32x128xf32, #tpu.memory_space<vmem>>, vector<32x128xf32>
    %1 = tpu.iota {dimensions = array<i32: 0>} : vector<32x1xi32>
    %c16_i32 = arith.constant 16 : i32
    %c0_i32 = arith.constant 0 : i32
    %2 = arith.cmpi eq, %c16_i32, %c0_i32 : i32
    %c1_i32 = arith.constant 1 : i32
    %3 = arith.select %2, %c1_i32, %c16_i32 : i32
    %4 = vector.broadcast %3 : i32 to vector<32x1xi32>
    %5 = arith.remsi %1, %4 : vector<32x1xi32>
    %c0_i32_1 = arith.constant 0 : i32
    %6 = vector.broadcast %c0_i32_1 : i32 to vector<32x1xi32>
    %7 = arith.cmpi ne, %5, %6 : vector<32x1xi32>
    %c0_i32_2 = arith.constant 0 : i32
    %8 = vector.broadcast %c0_i32_2 : i32 to vector<32x1xi32>
    %9 = arith.cmpi slt, %5, %8 : vector<32x1xi32>
    %c0_i32_3 = arith.constant 0 : i32
    %10 = arith.cmpi slt, %3, %c0_i32_3 : i32
    %11 = vector.broadcast %10 : i1 to vector<32x1xi1>
    %12 = vector.broadcast %11 : vector<32x1xi1> to vector<32x1xi1>
    %13 = arith.xori %9, %12 : vector<32x1xi1>
    %14 = arith.andi %13, %7 : vector<32x1xi1>
    %15 = vector.broadcast %3 : i32 to vector<32x1xi32>
    %16 = arith.addi %5, %15 : vector<32x1xi32>
    %17 = arith.select %14, %16, %5 : vector<32x1xi1>, vector<32x1xi32>
    %c3_i32 = arith.constant 3 : i32
    %18 = tpu.dynamic_rotate %0 by %c3_i32 dim 0 : vector<32x128xf32>, i32 -> vector<32x128xf32>
    %c-3_i32 = arith.constant -3 : i32
    %19 = vector.broadcast %c-3_i32 : i32 to vector<32x1xi32>
    %20 = arith.addi %17, %19 : vector<32x1xi32>
    %c0_i32_4 = arith.constant 0 : i32
    %21 = vector.broadcast %c0_i32_4 : i32 to vector<32x1xi32>
    %22 = arith.cmpi sge, %20, %21 : vector<32x1xi32>
    %c16_i32_5 = arith.constant 16 : i32
    %23 = vector.broadcast %c16_i32_5 : i32 to vector<32x1xi32>
    %24 = arith.cmpi slt, %20, %23 : vector<32x1xi32>
    %25 = arith.andi %22, %24 : vector<32x1xi1>
    %26 = arith.extui %25 : vector<32x1xi1> to vector<32x1xi32>
    %27 = arith.sitofp %26 : vector<32x1xi32> to vector<32x1xf32>
    %28 = vector.broadcast %27 : vector<32x1xf32> to vector<32x128xf32>
    %29 = arith.mulf %18, %28 : vector<32x128xf32>
    %c2_i32 = arith.constant 2 : i32
    %30 = tpu.dynamic_rotate %0 by %c2_i32 dim 0 : vector<32x128xf32>, i32 -> vector<32x128xf32>
    %c-2_i32 = arith.constant -2 : i32
    %31 = vector.broadcast %c-2_i32 : i32 to vector<32x1xi32>
    %32 = arith.addi %17, %31 : vector<32x1xi32>
    %c0_i32_6 = arith.constant 0 : i32
    %33 = vector.broadcast %c0_i32_6 : i32 to vector<32x1xi32>
    %34 = arith.cmpi sge, %32, %33 : vector<32x1xi32>
    %c16_i32_7 = arith.constant 16 : i32
    %35 = vector.broadcast %c16_i32_7 : i32 to vector<32x1xi32>
    %36 = arith.cmpi slt, %32, %35 : vector<32x1xi32>
    %37 = arith.andi %34, %36 : vector<32x1xi1>
    %38 = arith.extui %37 : vector<32x1xi1> to vector<32x1xi32>
    %39 = arith.sitofp %38 : vector<32x1xi32> to vector<32x1xf32>
    %40 = vector.broadcast %39 : vector<32x1xf32> to vector<32x128xf32>
    %41 = arith.mulf %30, %40 : vector<32x128xf32>
    %c1_i32_8 = arith.constant 1 : i32
    %42 = tpu.dynamic_rotate %0 by %c1_i32_8 dim 0 : vector<32x128xf32>, i32 -> vector<32x128xf32>
    %c-1_i32 = arith.constant -1 : i32
    %43 = vector.broadcast %c-1_i32 : i32 to vector<32x1xi32>
    %44 = arith.addi %17, %43 : vector<32x1xi32>
    %c0_i32_9 = arith.constant 0 : i32
    %45 = vector.broadcast %c0_i32_9 : i32 to vector<32x1xi32>
    %46 = arith.cmpi sge, %44, %45 : vector<32x1xi32>
    %c16_i32_10 = arith.constant 16 : i32
    %47 = vector.broadcast %c16_i32_10 : i32 to vector<32x1xi32>
    %48 = arith.cmpi slt, %44, %47 : vector<32x1xi32>
    %49 = arith.andi %46, %48 : vector<32x1xi1>
    %50 = arith.extui %49 : vector<32x1xi1> to vector<32x1xi32>
    %51 = arith.sitofp %50 : vector<32x1xi32> to vector<32x1xf32>
    %52 = vector.broadcast %51 : vector<32x1xf32> to vector<32x128xf32>
    %53 = arith.mulf %42, %52 : vector<32x128xf32>
    %c31_i32 = arith.constant 31 : i32
    %54 = tpu.dynamic_rotate %0 by %c31_i32 dim 0 : vector<32x128xf32>, i32 -> vector<32x128xf32>
    %c1_i32_11 = arith.constant 1 : i32
    %55 = vector.broadcast %c1_i32_11 : i32 to vector<32x1xi32>
    %56 = arith.addi %17, %55 : vector<32x1xi32>
    %c0_i32_12 = arith.constant 0 : i32
    %57 = vector.broadcast %c0_i32_12 : i32 to vector<32x1xi32>
    %58 = arith.cmpi sge, %56, %57 : vector<32x1xi32>
    %c16_i32_13 = arith.constant 16 : i32
    %59 = vector.broadcast %c16_i32_13 : i32 to vector<32x1xi32>
    %60 = arith.cmpi slt, %56, %59 : vector<32x1xi32>
    %61 = arith.andi %58, %60 : vector<32x1xi1>
    %62 = arith.extui %61 : vector<32x1xi1> to vector<32x1xi32>
    %63 = arith.sitofp %62 : vector<32x1xi32> to vector<32x1xf32>
    %64 = vector.broadcast %63 : vector<32x1xf32> to vector<32x128xf32>
    %65 = arith.mulf %54, %64 : vector<32x128xf32>
    %c30_i32 = arith.constant 30 : i32
    %66 = tpu.dynamic_rotate %0 by %c30_i32 dim 0 : vector<32x128xf32>, i32 -> vector<32x128xf32>
    %c2_i32_14 = arith.constant 2 : i32
    %67 = vector.broadcast %c2_i32_14 : i32 to vector<32x1xi32>
    %68 = arith.addi %17, %67 : vector<32x1xi32>
    %c0_i32_15 = arith.constant 0 : i32
    %69 = vector.broadcast %c0_i32_15 : i32 to vector<32x1xi32>
    %70 = arith.cmpi sge, %68, %69 : vector<32x1xi32>
    %c16_i32_16 = arith.constant 16 : i32
    %71 = vector.broadcast %c16_i32_16 : i32 to vector<32x1xi32>
    %72 = arith.cmpi slt, %68, %71 : vector<32x1xi32>
    %73 = arith.andi %70, %72 : vector<32x1xi1>
    %74 = arith.extui %73 : vector<32x1xi1> to vector<32x1xi32>
    %75 = arith.sitofp %74 : vector<32x1xi32> to vector<32x1xf32>
    %76 = vector.broadcast %75 : vector<32x1xf32> to vector<32x128xf32>
    %77 = arith.mulf %66, %76 : vector<32x128xf32>
    %c29_i32 = arith.constant 29 : i32
    %78 = tpu.dynamic_rotate %0 by %c29_i32 dim 0 : vector<32x128xf32>, i32 -> vector<32x128xf32>
    %c3_i32_17 = arith.constant 3 : i32
    %79 = vector.broadcast %c3_i32_17 : i32 to vector<32x1xi32>
    %80 = arith.addi %17, %79 : vector<32x1xi32>
    %c0_i32_18 = arith.constant 0 : i32
    %81 = vector.broadcast %c0_i32_18 : i32 to vector<32x1xi32>
    %82 = arith.cmpi sge, %80, %81 : vector<32x1xi32>
    %c16_i32_19 = arith.constant 16 : i32
    %83 = vector.broadcast %c16_i32_19 : i32 to vector<32x1xi32>
    %84 = arith.cmpi slt, %80, %83 : vector<32x1xi32>
    %85 = arith.andi %82, %84 : vector<32x1xi1>
    %86 = arith.extui %85 : vector<32x1xi1> to vector<32x1xi32>
    %87 = arith.sitofp %86 : vector<32x1xi32> to vector<32x1xf32>
    %88 = vector.broadcast %87 : vector<32x1xf32> to vector<32x128xf32>
    %89 = arith.mulf %78, %88 : vector<32x128xf32>
    %c16_i32_20 = arith.constant 16 : i32
    %90 = tpu.dynamic_rotate %41 by %c16_i32_20 dim 1 : vector<32x128xf32>, i32 -> vector<32x128xf32>
    %91 = arith.addf %29, %90 : vector<32x128xf32>
    %c32_i32 = arith.constant 32 : i32
    %92 = tpu.dynamic_rotate %53 by %c32_i32 dim 1 : vector<32x128xf32>, i32 -> vector<32x128xf32>
    %93 = arith.addf %91, %92 : vector<32x128xf32>
    %c48_i32 = arith.constant 48 : i32
    %94 = tpu.dynamic_rotate %0 by %c48_i32 dim 1 : vector<32x128xf32>, i32 -> vector<32x128xf32>
    %95 = arith.addf %93, %94 : vector<32x128xf32>
    %c64_i32 = arith.constant 64 : i32
    %96 = tpu.dynamic_rotate %65 by %c64_i32 dim 1 : vector<32x128xf32>, i32 -> vector<32x128xf32>
    %97 = arith.addf %95, %96 : vector<32x128xf32>
    %c80_i32 = arith.constant 80 : i32
    %98 = tpu.dynamic_rotate %77 by %c80_i32 dim 1 : vector<32x128xf32>, i32 -> vector<32x128xf32>
    %99 = arith.addf %97, %98 : vector<32x128xf32>
    %c96_i32 = arith.constant 96 : i32
    %100 = tpu.dynamic_rotate %89 by %c96_i32 dim 1 : vector<32x128xf32>, i32 -> vector<32x128xf32>
    %101 = arith.addf %99, %100 : vector<32x128xf32>
    %102 = arith.truncf %101 : vector<32x128xf32> to vector<32x128xbf16>
    %c0_21 = arith.constant 0 : index
    %c0_22 = arith.constant 0 : index
    %103 = vector.load %arg2[%c0_21, %c0_22] : memref<128x128xbf16, #tpu.memory_space<vmem>>, vector<128x128xbf16>
    %cst = arith.constant dense<0.000000e+00> : vector<32x128xf32>
    %104 = tpu.matmul %102, %103, %cst {dimension_numbers = #tpu.dot_dimension_numbers<[1], [0], [0], [1], [0, 0, 1, 1], [], []>} : vector<32x128xbf16>, vector<128x128xbf16>, vector<32x128xf32> -> vector<32x128xf32>
    %cst_23 = arith.constant dense<0.000000e+00> : vector<128xf32>
    %105 = vector.multi_reduction <add>, %104, %cst_23 [0] : vector<32x128xf32> to vector<128xf32>
    %106 = vector.shape_cast %105 : vector<128xf32> to vector<1x128xf32>
    %cst_24 = arith.constant 3.200000e+01 : f32
    %107 = vector.broadcast %cst_24 : f32 to vector<1x128xf32>
    %108 = arith.divf %106, %107 : vector<1x128xf32>
    %109 = vector.broadcast %108 : vector<1x128xf32> to vector<32x128xf32>
    %110 = arith.subf %104, %109 : vector<32x128xf32>
    %111 = arith.mulf %110, %110 : vector<32x128xf32>
    %cst_25 = arith.constant dense<0.000000e+00> : vector<128xf32>
    %112 = vector.multi_reduction <add>, %111, %cst_25 [0] : vector<32x128xf32> to vector<128xf32>
    %113 = vector.shape_cast %112 : vector<128xf32> to vector<1x128xf32>
    %cst_26 = arith.constant 3.200000e+01 : f32
    %114 = vector.broadcast %cst_26 : f32 to vector<1x128xf32>
    %115 = arith.divf %113, %114 : vector<1x128xf32>
    %116 = vector.broadcast %108 : vector<1x128xf32> to vector<32x128xf32>
    %117 = arith.subf %104, %116 : vector<32x128xf32>
    %cst_27 = arith.constant 9.99999974E-6 : f32
    %118 = vector.broadcast %cst_27 : f32 to vector<1x128xf32>
    %119 = arith.addf %115, %118 : vector<1x128xf32>
    %120 = math.rsqrt %119 : vector<1x128xf32>
    %121 = vector.broadcast %120 : vector<1x128xf32> to vector<32x128xf32>
    %122 = arith.mulf %117, %121 : vector<32x128xf32>
    %cst_28 = arith.constant 0.000000e+00 : f32
    %123 = vector.broadcast %cst_28 : f32 to vector<32x128xf32>
    %124 = arith.maximumf %122, %123 : vector<32x128xf32>
    %c3_i32_29 = arith.constant 3 : i32
    %125 = tpu.dynamic_rotate %124 by %c3_i32_29 dim 0 : vector<32x128xf32>, i32 -> vector<32x128xf32>
    %126 = vector.broadcast %27 : vector<32x1xf32> to vector<32x128xf32>
    %127 = arith.mulf %125, %126 : vector<32x128xf32>
    %c2_i32_30 = arith.constant 2 : i32
    %128 = tpu.dynamic_rotate %124 by %c2_i32_30 dim 0 : vector<32x128xf32>, i32 -> vector<32x128xf32>
    %129 = vector.broadcast %39 : vector<32x1xf32> to vector<32x128xf32>
    %130 = arith.mulf %128, %129 : vector<32x128xf32>
    %c1_i32_31 = arith.constant 1 : i32
    %131 = tpu.dynamic_rotate %124 by %c1_i32_31 dim 0 : vector<32x128xf32>, i32 -> vector<32x128xf32>
    %132 = vector.broadcast %51 : vector<32x1xf32> to vector<32x128xf32>
    %133 = arith.mulf %131, %132 : vector<32x128xf32>
    %c31_i32_32 = arith.constant 31 : i32
    %134 = tpu.dynamic_rotate %124 by %c31_i32_32 dim 0 : vector<32x128xf32>, i32 -> vector<32x128xf32>
    %135 = vector.broadcast %63 : vector<32x1xf32> to vector<32x128xf32>
    %136 = arith.mulf %134, %135 : vector<32x128xf32>
    %c30_i32_33 = arith.constant 30 : i32
    %137 = tpu.dynamic_rotate %124 by %c30_i32_33 dim 0 : vector<32x128xf32>, i32 -> vector<32x128xf32>
    %138 = vector.broadcast %75 : vector<32x1xf32> to vector<32x128xf32>
    %139 = arith.mulf %137, %138 : vector<32x128xf32>
    %c29_i32_34 = arith.constant 29 : i32
    %140 = tpu.dynamic_rotate %124 by %c29_i32_34 dim 0 : vector<32x128xf32>, i32 -> vector<32x128xf32>
    %141 = vector.broadcast %87 : vector<32x1xf32> to vector<32x128xf32>
    %142 = arith.mulf %140, %141 : vector<32x128xf32>
    %c40_i32 = arith.constant 40 : i32
    %143 = tpu.dynamic_rotate %130 by %c40_i32 dim 1 : vector<32x128xf32>, i32 -> vector<32x128xf32>
    %144 = arith.addf %127, %143 : vector<32x128xf32>
    %c80_i32_35 = arith.constant 80 : i32
    %145 = tpu.dynamic_rotate %133 by %c80_i32_35 dim 1 : vector<32x128xf32>, i32 -> vector<32x128xf32>
    %146 = arith.addf %144, %145 : vector<32x128xf32>
    %c40_i32_36 = arith.constant 40 : i32
    %147 = tpu.dynamic_rotate %136 by %c40_i32_36 dim 1 : vector<32x128xf32>, i32 -> vector<32x128xf32>
    %148 = arith.addf %124, %147 : vector<32x128xf32>
    %c80_i32_37 = arith.constant 80 : i32
    %149 = tpu.dynamic_rotate %139 by %c80_i32_37 dim 1 : vector<32x128xf32>, i32 -> vector<32x128xf32>
    %150 = arith.addf %148, %149 : vector<32x128xf32>
    %151 = tpu.concatenate %146, %150, %142 in 1 : vector<32x128xf32>, vector<32x128xf32>, vector<32x128xf32> -> vector<32x384xf32>
    %152 = arith.truncf %151 : vector<32x384xf32> to vector<32x384xbf16>
    %c0_38 = arith.constant 0 : index
    %c0_39 = arith.constant 0 : index
    %153 = vector.load %arg3[%c0_38, %c0_39] : memref<384x128xbf16, #tpu.memory_space<vmem>>, vector<384x128xbf16>
    %cst_40 = arith.constant dense<0.000000e+00> : vector<32x128xf32>
    %154 = tpu.matmul %152, %153, %cst_40 {dimension_numbers = #tpu.dot_dimension_numbers<[1], [0], [0], [1], [0, 0, 1, 1], [], []>} : vector<32x384xbf16>, vector<384x128xbf16>, vector<32x128xf32> -> vector<32x128xf32>
    %cst_41 = arith.constant dense<0.000000e+00> : vector<128xf32>
    %155 = vector.multi_reduction <add>, %154, %cst_41 [0] : vector<32x128xf32> to vector<128xf32>
    %156 = vector.shape_cast %155 : vector<128xf32> to vector<1x128xf32>
    %cst_42 = arith.constant 3.200000e+01 : f32
    %157 = vector.broadcast %cst_42 : f32 to vector<1x128xf32>
    %158 = arith.divf %156, %157 : vector<1x128xf32>
    %159 = vector.broadcast %158 : vector<1x128xf32> to vector<32x128xf32>
    %160 = arith.subf %154, %159 : vector<32x128xf32>
    %161 = arith.mulf %160, %160 : vector<32x128xf32>
    %cst_43 = arith.constant dense<0.000000e+00> : vector<128xf32>
    %162 = vector.multi_reduction <add>, %161, %cst_43 [0] : vector<32x128xf32> to vector<128xf32>
    %163 = vector.shape_cast %162 : vector<128xf32> to vector<1x128xf32>
    %cst_44 = arith.constant 3.200000e+01 : f32
    %164 = vector.broadcast %cst_44 : f32 to vector<1x128xf32>
    %165 = arith.divf %163, %164 : vector<1x128xf32>
    %166 = vector.broadcast %158 : vector<1x128xf32> to vector<32x128xf32>
    %167 = arith.subf %154, %166 : vector<32x128xf32>
    %cst_45 = arith.constant 9.99999974E-6 : f32
    %168 = vector.broadcast %cst_45 : f32 to vector<1x128xf32>
    %169 = arith.addf %165, %168 : vector<1x128xf32>
    %170 = math.rsqrt %169 : vector<1x128xf32>
    %171 = vector.broadcast %170 : vector<1x128xf32> to vector<32x128xf32>
    %172 = arith.mulf %167, %171 : vector<32x128xf32>
    %cst_46 = arith.constant 0.000000e+00 : f32
    %173 = vector.broadcast %cst_46 : f32 to vector<32x128xf32>
    %174 = arith.maximumf %172, %173 : vector<32x128xf32>
    %c31_i32_47 = arith.constant 31 : i32
    %175 = tpu.dynamic_rotate %174 by %c31_i32_47 dim 0 : vector<32x128xf32>, i32 -> vector<32x128xf32>
    %176 = vector.broadcast %63 : vector<32x1xf32> to vector<32x128xf32>
    %177 = arith.mulf %175, %176 : vector<32x128xf32>
    %c20_i32 = arith.constant 20 : i32
    %178 = tpu.dynamic_rotate %177 by %c20_i32 dim 1 : vector<32x128xf32>, i32 -> vector<32x128xf32>
    %179 = arith.addf %174, %178 : vector<32x128xf32>
    %180 = arith.truncf %179 : vector<32x128xf32> to vector<32x128xbf16>
    %c0_48 = arith.constant 0 : index
    %c0_49 = arith.constant 0 : index
    %181 = vector.load %arg4[%c0_48, %c0_49] : memref<128x128xbf16, #tpu.memory_space<vmem>>, vector<128x128xbf16>
    %cst_50 = arith.constant dense<0.000000e+00> : vector<32x128xf32>
    %182 = tpu.matmul %180, %181, %cst_50 {dimension_numbers = #tpu.dot_dimension_numbers<[1], [0], [0], [1], [0, 0, 1, 1], [], []>} : vector<32x128xbf16>, vector<128x128xbf16>, vector<32x128xf32> -> vector<32x128xf32>
    %cst_51 = arith.constant dense<0.000000e+00> : vector<128xf32>
    %183 = vector.multi_reduction <add>, %182, %cst_51 [0] : vector<32x128xf32> to vector<128xf32>
    %184 = vector.shape_cast %183 : vector<128xf32> to vector<1x128xf32>
    %cst_52 = arith.constant 3.200000e+01 : f32
    %185 = vector.broadcast %cst_52 : f32 to vector<1x128xf32>
    %186 = arith.divf %184, %185 : vector<1x128xf32>
    %187 = vector.broadcast %186 : vector<1x128xf32> to vector<32x128xf32>
    %188 = arith.subf %182, %187 : vector<32x128xf32>
    %189 = arith.mulf %188, %188 : vector<32x128xf32>
    %cst_53 = arith.constant dense<0.000000e+00> : vector<128xf32>
    %190 = vector.multi_reduction <add>, %189, %cst_53 [0] : vector<32x128xf32> to vector<128xf32>
    %191 = vector.shape_cast %190 : vector<128xf32> to vector<1x128xf32>
    %cst_54 = arith.constant 3.200000e+01 : f32
    %192 = vector.broadcast %cst_54 : f32 to vector<1x128xf32>
    %193 = arith.divf %191, %192 : vector<1x128xf32>
    %194 = vector.broadcast %186 : vector<1x128xf32> to vector<32x128xf32>
    %195 = arith.subf %182, %194 : vector<32x128xf32>
    %cst_55 = arith.constant 9.99999974E-6 : f32
    %196 = vector.broadcast %cst_55 : f32 to vector<1x128xf32>
    %197 = arith.addf %193, %196 : vector<1x128xf32>
    %198 = math.rsqrt %197 : vector<1x128xf32>
    %199 = vector.broadcast %198 : vector<1x128xf32> to vector<32x128xf32>
    %200 = arith.mulf %195, %199 : vector<32x128xf32>
    %cst_56 = arith.constant 0.000000e+00 : f32
    %201 = vector.broadcast %cst_56 : f32 to vector<32x128xf32>
    %202 = arith.maximumf %200, %201 : vector<32x128xf32>
    %203 = vector.shape_cast %202 : vector<32x128xf32> to vector<2x16x128xf32>
    %cst_57 = arith.constant dense<0.000000e+00> : vector<2x128xf32>
    %204 = vector.multi_reduction <add>, %203, %cst_57 [1] : vector<2x16x128xf32> to vector<2x128xf32>
    %cst_58 = arith.constant 6.250000e-02 : f32
    %205 = vector.broadcast %cst_58 : f32 to vector<2x128xf32>
    %206 = arith.mulf %204, %205 : vector<2x128xf32>
    %c0_59 = arith.constant 0 : index
    %c0_60 = arith.constant 0 : index
    %207 = vector.load %arg5[%c0_59, %c0_60] : memref<2x128xf32, #tpu.memory_space<vmem>>, vector<2x128xf32>
    tpu.vector_store %arg5[%c0_59, %c0_60], %206 {strides = array<i32>} : memref<2x128xf32, #tpu.memory_space<vmem>>, vector<2x128xf32>,
    return
  }
  func.func @transform_0(%arg0: i32) -> (i32, i32) {
    %c0_i32 = arith.constant 0 : i32
    %c0_i32_0 = arith.constant 0 : i32
    %c0_i32_1 = arith.constant 0 : i32
    return %c0_i32, %c0_i32_0 : i32, i32
  }
  func.func @transform_1(%arg0: i32) -> (i32, i32) {
    %c0_i32 = arith.constant 0 : i32
    %c0_i32_0 = arith.constant 0 : i32
    %c0_i32_1 = arith.constant 0 : i32
    return %c0_i32, %c0_i32_0 : i32, i32
  }
  func.func @transform_2(%arg0: i32) -> (i32, i32) {
    %c0_i32 = arith.constant 0 : i32
    %c0_i32_0 = arith.constant 0 : i32
    %c0_i32_1 = arith.constant 0 : i32
    return %c0_i32, %c0_i32_0 : i32, i32
  }
  func.func @transform_3(%arg0: i32) -> (i32, i32) {
    %c0_i32 = arith.constant 0 : i32
    %c0_i32_0 = arith.constant 0 : i32
    %c0_i32_1 = arith.constant 0 : i32
    return %c0_i32, %c0_i32_0 : i32, i32
  }
  func.func @transform_4(%arg0: i32) -> (i32, i32) {
    %c0_i32 = arith.constant 0 : i32
    %c0_i32_0 = arith.constant 0 : i32
    %c0_i32_1 = arith.constant 0 : i32
    return %c0_i32, %c0_i32_0 : i32, i32
  }
}

</mosaic_0001>

<llo_original>
// kernel: _fwd.1
$region0: #{_fwd.1}
  #allocation0 [shape = 'u32[]', space=smem, size = 0x4, offset = 0x4, fixed_abs, tag = 'smem constant byte address 0x4 - core index']
  #allocation1 [shape = 'u32[72,128]{1,0:T(1,128)}', space=vmem, size = 0x9000, scoped, tag = 'internal scratch']
  %s0 = inlined_call_operand.vmem [shape: f32[32,128], index: 0, kind: input, shape index: {}]
  %s1 = inlined_call_operand.vmem [shape: bf16[128,128], index: 1, kind: input, shape index: {}]
  %s2 = inlined_call_operand.hbm [shape: bf16[384,128], index: 2, kind: input, shape index: {}]
  %s3 = inlined_call_operand.vmem [shape: bf16[128,128], index: 3, kind: input, shape index: {}]
  %s4 = inlined_call_operand.hbm [shape: f32[2,128], index: 4, kind: output, shape index: {}]
  %s5 = sld [smem:[#allocation0]]
  $region30: #{_fwd.1} parent=0
    _
  %s7 = ssub.s32 1, %s5
  %s8 = scalar_select 0, %s7, %s5
  $region1: #{_fwd.1} parent=0
    #allocation2 [shape = 'u8[98304]{0}', space=vmem, size = 0x18000, scoped, tag = 'input window, operand 2, single buffered']
    #allocation3 [shape = 's32[1]{0}', space=sflag, size = 0x4, scoped, tag = 'scoped memory for _fwd.1']
    #allocation4 [shape = 's32[1]{0}', space=sflag, size = 0x4, scoped, tag = 'scoped memory for _fwd.1']
    #allocation5 [shape = 'u8[1024]{0}', space=vmem, size = 0x400, scoped, tag = 'output window, operand 0, single buffered']
    %9 = vsyncpa [#allocation3], 0
    %10 = vsyncpa [#allocation4], 0
    // Predicated region
    $region2: #{_fwd.1} parent=1 // pred_check
      _
    $region3: #{_fwd.1} parent=1 // pred_check_branch
      %12 = sbr.rel (0) target = $region5
    $region4: #{_fwd.1} parent=1 // pred_region
      _
    $region5: #{_fwd.1} parent=1 // pred_fallthru
      _
    // Predicated region
    $region6: #{_fwd.1} parent=1 // pred_check
      _
    $region7: #{_fwd.1} parent=1 // pred_check_branch
      %14 = sbr.rel (0) target = $region9
    $region8: #{_fwd.1} parent=1 // pred_region
      _
    $region9: #{_fwd.1} parent=1 // pred_fallthru
      _
    // Predicated region
    $region10: #{_fwd.1} parent=1 // pred_check
      _
    $region11: #{_fwd.1} parent=1 // pred_check_branch
      %16 = sbr.rel (0) target = $region13
    $region12: #{_fwd.1} parent=1 // pred_region
      %18 = vsyncadd [#allocation3], 0
      %s19 = sshll.u32 %s2, 4
      %s20 = int_to_ptr.hbm [resolvable:$true] %s19
      %s21 = sshll.u32 [#allocation2], 4
      %s22 = int_to_ptr.vmem [resolvable:$true] %s21
      %27 = dma.hbm_to_vmem [thread:$0]  %s20, 3072, %s22, [#allocation3], 64, 64, 4
    $region13: #{_fwd.1} parent=1 // pred_fallthru
      _
    // Predicated region
    $region14: #{_fwd.1} parent=1 // pred_check
      _
    $region15: #{_fwd.1} parent=1 // pred_check_branch
      %29 = sbr.rel (0) target = $region17
    $region16: #{_fwd.1} parent=1 // pred_region
      _
    $region17: #{_fwd.1} parent=1 // pred_fallthru
      _
    // Predicated region
    $region18: #{_fwd.1} parent=1 // pred_check
      _
    $region19: #{_fwd.1} parent=1 // pred_check_branch
      %31 = sbr.rel (0) target = $region21
    $region20: #{_fwd.1} parent=1 // pred_region
      %33 = dma.done [#allocation3], 3072
    $region21: #{_fwd.1} parent=1 // pred_fallthru
      _
    %v34 = vld [vmem:[%s0] sm:$0xff]
    %v35 = vld [vmem:[%s0 + $0x8] sm:$0xff]
    %v36 = vld [vmem:[%s0 + $0x10] sm:$0xff]
    %v37 = vld [vmem:[%s0 + $0x18] sm:$0xff]
    %v38 = vlaneseq
    %v39 = vshrl.u32 %v38, 7
    %v40 = vadd.s32 %v39, 8
    %v41 = vadd.s32 %v39, 16
    %v42 = vadd.s32 %v39, 24
    %vm43 = vcmp.lt.s32.totalorder %v39, 0
    %v44 = vsub.s32 0, %v39
    %v45 = vsel %vm43, %v44, %v39
    %v46 = vshrl.u32 %v45, 4
    %v47 = vand.u32 %v45, 15
    %v48 = vsub.s32 0, %v47
    %v49 = vsel %vm43, %v48, %v47
    %vm50 = vcmp.lt.s32.totalorder %v40, 0
    %v51 = vsub.s32 0, %v40
    %v52 = vsel %vm50, %v51, %v40
    %v53 = vshrl.u32 %v52, 4
    %v54 = vand.u32 %v52, 15
    %v55 = vsub.s32 0, %v54
    %v56 = vsel %vm50, %v55, %v54
    %vm57 = vcmp.lt.s32.totalorder %v41, 0
    %v58 = vsub.s32 0, %v41
    %v59 = vsel %vm57, %v58, %v41
    %v60 = vshrl.u32 %v59, 4
    %v61 = vand.u32 %v59, 15
    %v62 = vsub.s32 0, %v61
    %v63 = vsel %vm57, %v62, %v61
    %vm64 = vcmp.lt.s32.totalorder %v42, 0
    %v65 = vsub.s32 0, %v42
    %v66 = vsel %vm64, %v65, %v42
    %v67 = vshrl.u32 %v66, 4
    %v68 = vand.u32 %v66, 15
    %v69 = vsub.s32 0, %v68
    %v70 = vsel %vm64, %v69, %v68
    %vm71 = vcmp.ne.s32.totalorder %v49, 0
    %vm72 = vcmp.ne.s32.totalorder %v56, 0
    %vm73 = vcmp.ne.s32.totalorder %v63, 0
    %vm74 = vcmp.ne.s32.totalorder %v70, 0
    %vm75 = vcmp.lt.s32.totalorder %v49, 0
    %vm76 = vcmp.lt.s32.totalorder %v56, 0
    %vm77 = vcmp.lt.s32.totalorder %v63, 0
    %vm78 = vcmp.lt.s32.totalorder %v70, 0
    %vm79 = vmand %vm75, %vm71
    %vm80 = vmand %vm76, %vm72
    %vm81 = vmand %vm77, %vm73
    %vm82 = vmand %vm78, %vm74
    %v83 = vadd.s32 %v49, 16
    %v84 = vadd.s32 %v56, 16
    %v85 = vadd.s32 %v63, 16
    %v86 = vadd.s32 %v70, 16
    %v87 = vsel %vm79, %v83, %v49
    %v88 = vsel %vm80, %v84, %v56
    %v89 = vsel %vm81, %v85, %v63
    %v90 = vsel %vm82, %v86, %v70
    %v91 = vrot.slane %v34, 5
    %v92 = vrot.slane %v35, 5
    %v93 = vrot.slane %v36, 5
    %v94 = vrot.slane %v37, 5
    %vm95 = vcmp.lt.s32.totalorder %v39, 3
    %v96 = vsel %vm95, %v93, %v94
    %v97 = vsel %vm95, %v92, %v93
    %v98 = vsel %vm95, %v91, %v92
    %v99 = vsel %vm95, %v94, %v91
    %v100 = vadd.s32 %v87, 4294967293
    %v101 = vadd.s32 %v88, 4294967293
    %v102 = vadd.s32 %v89, 4294967293
    %v103 = vadd.s32 %v90, 4294967293
    %vm104 = vcmp.ge.s32.totalorder %v100, 0
    %vm105 = vcmp.ge.s32.totalorder %v101, 0
    %vm106 = vcmp.ge.s32.totalorder %v102, 0
    %vm107 = vcmp.ge.s32.totalorder %v103, 0
    %vm108 = vcmp.lt.s32.totalorder %v100, 16
    %vm109 = vcmp.lt.s32.totalorder %v101, 16
    %vm110 = vcmp.lt.s32.totalorder %v102, 16
    %vm111 = vcmp.lt.s32.totalorder %v103, 16
    %vm112 = vmand %vm104, %vm108
    %vm113 = vmand %vm105, %vm109
    %vm114 = vmand %vm106, %vm110
    %vm115 = vmand %vm107, %vm111
    %v116 = vsel %vm112, 1, 0
    %v117 = vsel %vm113, 1, 0
    %v118 = vsel %vm114, 1, 0
    %v119 = vsel %vm115, 1, 0
    %v120 = vcvt.s32.f32 %v116
    %v121 = vcvt.s32.f32 %v117
    %v122 = vcvt.s32.f32 %v118
    %v123 = vcvt.s32.f32 %v119
    %v124 = vmul.f32 %v99, %v120
    %v125 = vmul.f32 %v98, %v121
    %v126 = vmul.f32 %v97, %v122
    %v127 = vmul.f32 %v96, %v123
    %v128 = vrot.slane %v34, 6
    %v129 = vrot.slane %v35, 6
    %v130 = vrot.slane %v36, 6
    %v131 = vrot.slane %v37, 6
    %vm132 = vcmp.lt.s32.totalorder %v39, 2
    %v133 = vsel %vm132, %v130, %v131
    %v134 = vsel %vm132, %v129, %v130
    %v135 = vsel %vm132, %v128, %v129
    %v136 = vsel %vm132, %v131, %v128
    %v137 = vadd.s32 %v87, 4294967294
    %v138 = vadd.s32 %v88, 4294967294
    %v139 = vadd.s32 %v89, 4294967294
    %v140 = vadd.s32 %v90, 4294967294
    %vm141 = vcmp.ge.s32.totalorder %v137, 0
    %vm142 = vcmp.ge.s32.totalorder %v138, 0
    %vm143 = vcmp.ge.s32.totalorder %v139, 0
    %vm144 = vcmp.ge.s32.totalorder %v140, 0
    %vm145 = vcmp.lt.s32.totalorder %v137, 16
    %vm146 = vcmp.lt.s32.totalorder %v138, 16
    %vm147 = vcmp.lt.s32.totalorder %v139, 16
    %vm148 = vcmp.lt.s32.totalorder %v140, 16
    %vm149 = vmand %vm141, %vm145
    %vm150 = vmand %vm142, %vm146
    %vm151 = vmand %vm143, %vm147
    %vm152 = vmand %vm144, %vm148
    %v153 = vsel %vm149, 1, 0
    %v154 = vsel %vm150, 1, 0
    %v155 = vsel %vm151, 1, 0
    %v156 = vsel %vm152, 1, 0
    %v157 = vcvt.s32.f32 %v153
    %v158 = vcvt.s32.f32 %v154
    %v159 = vcvt.s32.f32 %v155
    %v160 = vcvt.s32.f32 %v156
    %v161 = vmul.f32 %v136, %v157
    %v162 = vmul.f32 %v135, %v158
    %v163 = vmul.f32 %v134, %v159
    %v164 = vmul.f32 %v133, %v160
    %v165 = vrot.slane %v34, 7
    %v166 = vrot.slane %v35, 7
    %v167 = vrot.slane %v36, 7
    %v168 = vrot.slane %v37, 7
    %vm169 = vcmp.lt.s32.totalorder %v39, 1
    %v170 = vsel %vm169, %v167, %v168
    %v171 = vsel %vm169, %v166, %v167
    %v172 = vsel %vm169, %v165, %v166
    %v173 = vsel %vm169, %v168, %v165
    %v174 = vadd.s32 %v87, 4294967295
    %v175 = vadd.s32 %v88, 4294967295
    %v176 = vadd.s32 %v89, 4294967295
    %v177 = vadd.s32 %v90, 4294967295
    %vm178 = vcmp.ge.s32.totalorder %v174, 0
    %vm179 = vcmp.ge.s32.totalorder %v175, 0
    %vm180 = vcmp.ge.s32.totalorder %v176, 0
    %vm181 = vcmp.ge.s32.totalorder %v177, 0
    %vm182 = vcmp.lt.s32.totalorder %v174, 16
    %vm183 = vcmp.lt.s32.totalorder %v175, 16
    %vm184 = vcmp.lt.s32.totalorder %v176, 16
    %vm185 = vcmp.lt.s32.totalorder %v177, 16
    %vm186 = vmand %vm178, %vm182
    %vm187 = vmand %vm179, %vm183
    %vm188 = vmand %vm180, %vm184
    %vm189 = vmand %vm181, %vm185
    %v190 = vsel %vm186, 1, 0
    %v191 = vsel %vm187, 1, 0
    %v192 = vsel %vm188, 1, 0
    %v193 = vsel %vm189, 1, 0
    %v194 = vcvt.s32.f32 %v190
    %v195 = vcvt.s32.f32 %v191
    %v196 = vcvt.s32.f32 %v192
    %v197 = vcvt.s32.f32 %v193
    %v198 = vmul.f32 %v173, %v194
    %v199 = vmul.f32 %v172, %v195
    %v200 = vmul.f32 %v171, %v196
    %v201 = vmul.f32 %v170, %v197
    %v202 = vrot.slane %v34, 1
    %v203 = vrot.slane %v35, 1
    %v204 = vrot.slane %v36, 1
    %v205 = vrot.slane %v37, 1
    %vm206 = vcmp.lt.s32.totalorder %v39, 7
    %v207 = vsel %vm206, %v204, %v205
    %v208 = vsel %vm206, %v203, %v204
    %v209 = vsel %vm206, %v202, %v203
    %v210 = vsel %vm206, %v205, %v202
    %v211 = vadd.s32 %v87, 1
    %v212 = vadd.s32 %v88, 1
    %v213 = vadd.s32 %v89, 1
    %v214 = vadd.s32 %v90, 1
    %vm215 = vcmp.ge.s32.totalorder %v211, 0
    %vm216 = vcmp.ge.s32.totalorder %v212, 0
    %vm217 = vcmp.ge.s32.totalorder %v213, 0
    %vm218 = vcmp.ge.s32.totalorder %v214, 0
    %vm219 = vcmp.lt.s32.totalorder %v211, 16
    %vm220 = vcmp.lt.s32.totalorder %v212, 16
    %vm221 = vcmp.lt.s32.totalorder %v213, 16
    %vm222 = vcmp.lt.s32.totalorder %v214, 16
    %vm223 = vmand %vm215, %vm219
    %vm224 = vmand %vm216, %vm220
    %vm225 = vmand %vm217, %vm221
    %vm226 = vmand %vm218, %vm222
    %v227 = vsel %vm223, 1, 0
    %v228 = vsel %vm224, 1, 0
    %v229 = vsel %vm225, 1, 0
    %v230 = vsel %vm226, 1, 0
    %v231 = vcvt.s32.f32 %v227
    %v232 = vcvt.s32.f32 %v228
    %v233 = vcvt.s32.f32 %v229
    %v234 = vcvt.s32.f32 %v230
    %v235 = vmul.f32 %v209, %v231
    %v236 = vmul.f32 %v208, %v232
    %v237 = vmul.f32 %v207, %v233
    %v238 = vmul.f32 %v210, %v234
    %v239 = vrot.slane %v34, 2
    %v240 = vrot.slane %v35, 2
    %v241 = vrot.slane %v36, 2
    %v242 = vrot.slane %v37, 2
    %vm243 = vcmp.lt.s32.totalorder %v39, 6
    %v244 = vsel %vm243, %v241, %v242
    %v245 = vsel %vm243, %v240, %v241
    %v246 = vsel %vm243, %v239, %v240
    %v247 = vsel %vm243, %v242, %v239
    %v248 = vadd.s32 %v87, 2
    %v249 = vadd.s32 %v88, 2
    %v250 = vadd.s32 %v89, 2
    %v251 = vadd.s32 %v90, 2
    %vm252 = vcmp.ge.s32.totalorder %v248, 0
    %vm253 = vcmp.ge.s32.totalorder %v249, 0
    %vm254 = vcmp.ge.s32.totalorder %v250, 0
    %vm255 = vcmp.ge.s32.totalorder %v251, 0
    %vm256 = vcmp.lt.s32.totalorder %v248, 16
    %vm257 = vcmp.lt.s32.totalorder %v249, 16
    %vm258 = vcmp.lt.s32.totalorder %v250, 16
    %vm259 = vcmp.lt.s32.totalorder %v251, 16
    %vm260 = vmand %vm252, %vm256
    %vm261 = vmand %vm253, %vm257
    %vm262 = vmand %vm254, %vm258
    %vm263 = vmand %vm255, %vm259
    %v264 = vsel %vm260, 1, 0
    %v265 = vsel %vm261, 1, 0
    %v266 = vsel %vm262, 1, 0
    %v267 = vsel %vm263, 1, 0
    %v268 = vcvt.s32.f32 %v264
    %v269 = vcvt.s32.f32 %v265
    %v270 = vcvt.s32.f32 %v266
    %v271 = vcvt.s32.f32 %v267
    %v272 = vmul.f32 %v246, %v268
    %v273 = vmul.f32 %v245, %v269
    %v274 = vmul.f32 %v244, %v270
    %v275 = vmul.f32 %v247, %v271
    %v276 = vrot.slane %v34, 3
    %v277 = vrot.slane %v35, 3
    %v278 = vrot.slane %v36, 3
    %v279 = vrot.slane %v37, 3
    %vm280 = vcmp.lt.s32.totalorder %v39, 5
    %v281 = vsel %vm280, %v278, %v279
    %v282 = vsel %vm280, %v277, %v278
    %v283 = vsel %vm280, %v276, %v277
    %v284 = vsel %vm280, %v279, %v276
    %v285 = vadd.s32 %v87, 3
    %v286 = vadd.s32 %v88, 3
    %v287 = vadd.s32 %v89, 3
    %v288 = vadd.s32 %v90, 3
    %vm289 = vcmp.ge.s32.totalorder %v285, 0
    %vm290 = vcmp.ge.s32.totalorder %v286, 0
    %vm291 = vcmp.ge.s32.totalorder %v287, 0
    %vm292 = vcmp.ge.s32.totalorder %v288, 0
    %vm293 = vcmp.lt.s32.totalorder %v285, 16
    %vm294 = vcmp.lt.s32.totalorder %v286, 16
    %vm295 = vcmp.lt.s32.totalorder %v287, 16
    %vm296 = vcmp.lt.s32.totalorder %v288, 16
    %vm297 = vmand %vm289, %vm293
    %vm298 = vmand %vm290, %vm294
    %vm299 = vmand %vm291, %vm295
    %vm300 = vmand %vm292, %vm296
    %v301 = vsel %vm297, 1, 0
    %v302 = vsel %vm298, 1, 0
    %v303 = vsel %vm299, 1, 0
    %v304 = vsel %vm300, 1, 0
    %v305 = vcvt.s32.f32 %v301
    %v306 = vcvt.s32.f32 %v302
    %v307 = vcvt.s32.f32 %v303
    %v308 = vcvt.s32.f32 %v304
    %v309 = vmul.f32 %v283, %v305
    %v310 = vmul.f32 %v282, %v306
    %v311 = vmul.f32 %v281, %v307
    %v312 = vmul.f32 %v284, %v308
    %313 = vrot.lane.b32.xlu0 %v161, 16
    %v314 = vpop.permute.xlu0 %313
    %315 = vrot.lane.b32.xlu0 %v162, 16
    %v316 = vpop.permute.xlu0 %315
    %317 = vrot.lane.b32.xlu0 %v163, 16
    %v318 = vpop.permute.xlu0 %317
    %319 = vrot.lane.b32.xlu0 %v164, 16
    %v320 = vpop.permute.xlu0 %319
    %v321 = vadd.f32 %v124, %v314
    %v322 = vadd.f32 %v125, %v316
    %v323 = vadd.f32 %v126, %v318
    %v324 = vadd.f32 %v127, %v320
    %325 = vrot.lane.b32.xlu0 %v198, 32
    %v326 = vpop.permute.xlu0 %325
    %327 = vrot.lane.b32.xlu0 %v199, 32
    %v328 = vpop.permute.xlu0 %327
    %329 = vrot.lane.b32.xlu0 %v200, 32
    %v330 = vpop.permute.xlu0 %329
    %331 = vrot.lane.b32.xlu0 %v201, 32
    %v332 = vpop.permute.xlu0 %331
    %v333 = vadd.f32 %v321, %v326
    %v334 = vadd.f32 %v322, %v328
    %v335 = vadd.f32 %v323, %v330
    %v336 = vadd.f32 %v324, %v332
    %337 = vrot.lane.b32.xlu0 %v34, 48
    %v338 = vpop.permute.xlu0 %337
    %339 = vrot.lane.b32.xlu0 %v35, 48
    %v340 = vpop.permute.xlu0 %339
    %341 = vrot.lane.b32.xlu0 %v36, 48
    %v342 = vpop.permute.xlu0 %341
    %343 = vrot.lane.b32.xlu0 %v37, 48
    %v344 = vpop.permute.xlu0 %343
    %v345 = vadd.f32 %v333, %v338
    %v346 = vadd.f32 %v334, %v340
    %v347 = vadd.f32 %v335, %v342
    %v348 = vadd.f32 %v336, %v344
    %349 = vrot.lane.b32.xlu0 %v235, 64
    %v350 = vpop.permute.xlu0 %349
    %351 = vrot.lane.b32.xlu0 %v236, 64
    %v352 = vpop.permute.xlu0 %351
    %353 = vrot.lane.b32.xlu0 %v237, 64
    %v354 = vpop.permute.xlu0 %353
    %355 = vrot.lane.b32.xlu0 %v238, 64
    %v356 = vpop.permute.xlu0 %355
    %v357 = vadd.f32 %v345, %v350
    %v358 = vadd.f32 %v346, %v352
    %v359 = vadd.f32 %v347, %v354
    %v360 = vadd.f32 %v348, %v356
    %361 = vrot.lane.b32.xlu0 %v272, 80
    %v362 = vpop.permute.xlu0 %361
    %363 = vrot.lane.b32.xlu0 %v273, 80
    %v364 = vpop.permute.xlu0 %363
    %365 = vrot.lane.b32.xlu0 %v274, 80
    %v366 = vpop.permute.xlu0 %365
    %367 = vrot.lane.b32.xlu0 %v275, 80
    %v368 = vpop.permute.xlu0 %367
    %v369 = vadd.f32 %v357, %v362
    %v370 = vadd.f32 %v358, %v364
    %v371 = vadd.f32 %v359, %v366
    %v372 = vadd.f32 %v360, %v368
    %373 = vrot.lane.b32.xlu0 %v309, 96
    %v374 = vpop.permute.xlu0 %373
    %375 = vrot.lane.b32.xlu0 %v310, 96
    %v376 = vpop.permute.xlu0 %375
    %377 = vrot.lane.b32.xlu0 %v311, 96
    %v378 = vpop.permute.xlu0 %377
    %379 = vrot.lane.b32.xlu0 %v312, 96
    %v380 = vpop.permute.xlu0 %379
    %v381 = vadd.f32 %v369, %v374
    %v382 = vadd.f32 %v370, %v376
    %v383 = vadd.f32 %v371, %v378
    %v384 = vadd.f32 %v372, %v380
    %v385 = vpack.c.bf16 %v382, %v381
    %v386 = vpack.c.bf16 %v384, %v383
    %v387 = vld [vmem:[%s1] sm:$0xf]
    %v388 = vld [vmem:[%s1 + $0x4] sm:$0xf]
    %v389 = vld [vmem:[%s1 + $0x8] sm:$0xf]
    %v390 = vld [vmem:[%s1 + $0xc] sm:$0xf]
    %v391 = vld [vmem:[%s1 + $0x10] sm:$0xf]
    %v392 = vld [vmem:[%s1 + $0x14] sm:$0xf]
    %v393 = vld [vmem:[%s1 + $0x18] sm:$0xf]
    %v394 = vld [vmem:[%s1 + $0x1c] sm:$0xf]
    %v395 = vld [vmem:[%s1 + $0x20] sm:$0xf]
    %v396 = vld [vmem:[%s1 + $0x24] sm:$0xf]
    %v397 = vld [vmem:[%s1 + $0x28] sm:$0xf]
    %v398 = vld [vmem:[%s1 + $0x2c] sm:$0xf]
    %v399 = vld [vmem:[%s1 + $0x30] sm:$0xf]
    %v400 = vld [vmem:[%s1 + $0x34] sm:$0xf]
    %v401 = vld [vmem:[%s1 + $0x38] sm:$0xf]
    %v402 = vld [vmem:[%s1 + $0x3c] sm:$0xf]
    %v419 = vunpack.c.l.b16 %v387
    %v420 = vunpack.c.l.b16 %v388
    %v421 = vunpack.c.l.b16 %v389
    %v422 = vunpack.c.l.b16 %v390
    %v423 = vunpack.c.l.b16 %v391
    %v424 = vunpack.c.l.b16 %v392
    %v425 = vunpack.c.l.b16 %v393
    %v426 = vunpack.c.l.b16 %v394
    %v427 = vunpack.c.l.b16 %v395
    %v428 = vunpack.c.l.b16 %v396
    %v429 = vunpack.c.l.b16 %v397
    %v430 = vunpack.c.l.b16 %v398
    %v431 = vunpack.c.l.b16 %v399
    %v432 = vunpack.c.l.b16 %v400
    %v433 = vunpack.c.l.b16 %v401
    %v434 = vunpack.c.l.b16 %v402
    %v435 = vpack.c.b16 %v420, %v419
    %v436 = vpack.c.b16 %v422, %v421
    %v437 = vpack.c.b16 %v424, %v423
    %v438 = vpack.c.b16 %v426, %v425
    %v439 = vpack.c.b16 %v428, %v427
    %v440 = vpack.c.b16 %v430, %v429
    %v441 = vpack.c.b16 %v432, %v431
    %v442 = vpack.c.b16 %v434, %v433
    %451 = vmatpush.bf16.msra.mxu0 %v442
    %452 = vmatpush.bf16.msra.mxu0 %v441
    %453 = vmatpush.bf16.msra.mxu0 %v440
    %454 = vmatpush.bf16.msra.mxu0 %v439
    %455 = vmatpush.bf16.msra.mxu0 %v438
    %456 = vmatpush.bf16.msra.mxu0 %v437
    %457 = vmatpush.bf16.msra.mxu0 %v436
    %458 = vmatpush.bf16.msra.mxu0 %v435
    %459 = vmatmul.bf16.gmra.mxu0 %v385
    %v460 = vpop.f32.mrf.mxu0
    %v461 = vadd.f32 0.0, %v460
    %v462 = vpop.f32.mrf.mxu0
    %v463 = vadd.f32 0.0, %v462
    %464 = vmatmul.bf16.gmra.mxu0 %v386
    %v465 = vpop.f32.mrf.mxu0
    %v466 = vadd.f32 0.0, %v465
    %v467 = vpop.f32.mrf.mxu0
    %v468 = vadd.f32 0.0, %v467
    %469 = vdwg.mxu0
    %v470 = vadd.f32 %v461, %v463
    %v471 = vadd.f32 %v470, %v466
    %v472 = vadd.f32 %v471, %v468
    %v473 = vrot.slane %v472, 4
    %v474 = vadd.f32 %v472, %v473
    %v475 = vrot.slane %v474, 2
    %v476 = vadd.f32 %v474, %v475
    %v477 = vrot.slane %v476, 1
    %v478 = vadd.f32 %v476, %v477
    %v479 = vrcp.pop 32.0
    %v480 = vmul.f32 32.0, %v479
    %v481 = vsub.f32 1.0, %v480
    %v482 = vmul.f32 %v479, %v481
    %v483 = vadd.f32 %v479, %v482
    %vm484 = vweird.f32 %v479
    %v485 = vsel %vm484, %v479, %v483
    %v486 = vmul.f32 %v478, %v485
    %v487 = vsub.f32 %v461, %v486
    %v488 = vsub.f32 %v463, %v486
    %v489 = vsub.f32 %v466, %v486
    %v490 = vsub.f32 %v468, %v486
    %v491 = vmul.f32 %v487, %v487
    %v492 = vmul.f32 %v488, %v488
    %v493 = vmul.f32 %v489, %v489
    %v494 = vmul.f32 %v490, %v490
    %v495 = vadd.f32 %v491, %v492
    %v496 = vadd.f32 %v495, %v493
    %v497 = vadd.f32 %v496, %v494
    %v498 = vrot.slane %v497, 4
    %v499 = vadd.f32 %v497, %v498
    %v500 = vrot.slane %v499, 2
    %v501 = vadd.f32 %v499, %v500
    %v502 = vrot.slane %v501, 1
    %v503 = vadd.f32 %v501, %v502
    %v504 = vmul.f32 %v503, %v485
    %v505 = vadd.f32 %v504, 1e-05
    %v506 = vrsqrt.pop %v505
    %v507 = vmul.f32 %v506, %v505
    %v508 = vmul.f32 %v507, %v506
    %v509 = vmul.f32 0.5, %v508
    %v510 = vsub.f32 1.5, %v509
    %v511 = vmul.f32 %v506, %v510
    %vm512 = vweird.f32 %v505
    %vm513 = vweird.f32 %v506
    %vm514 = vmor %vm512, %vm513
    %v515 = vsel %vm514, %v506, %v511
    %v516 = vmul.f32 %v487, %v515
    %v517 = vmul.f32 %v488, %v515
    %v518 = vmul.f32 %v489, %v515
    %v519 = vmul.f32 %v490, %v515
    %v520 = vmax.f32 %v516, 0.0
    %v521 = vmax.f32 %v517, 0.0
    %v522 = vmax.f32 %v518, 0.0
    %v523 = vmax.f32 %v519, 0.0
    %v524 = vrot.slane %v520, 5
    %v525 = vrot.slane %v521, 5
    %v526 = vrot.slane %v522, 5
    %v527 = vrot.slane %v523, 5
    %v528 = vsel %vm95, %v526, %v527
    %v529 = vsel %vm95, %v525, %v526
    %v530 = vsel %vm95, %v524, %v525
    %v531 = vsel %vm95, %v527, %v524
    %v532 = vmul.f32 %v531, %v120
    %v533 = vmul.f32 %v530, %v121
    %v534 = vmul.f32 %v529, %v122
    %v535 = vmul.f32 %v528, %v123
    %v536 = vrot.slane %v520, 6
    %v537 = vrot.slane %v521, 6
    %v538 = vrot.slane %v522, 6
    %v539 = vrot.slane %v523, 6
    %v540 = vsel %vm132, %v538, %v539
    %v541 = vsel %vm132, %v537, %v538
    %v542 = vsel %vm132, %v536, %v537
    %v543 = vsel %vm132, %v539, %v536
    %v544 = vmul.f32 %v543, %v157
    %v545 = vmul.f32 %v542, %v158
    %v546 = vmul.f32 %v541, %v159
    %v547 = vmul.f32 %v540, %v160
    %v548 = vrot.slane %v520, 7
    %v549 = vrot.slane %v521, 7
    %v550 = vrot.slane %v522, 7
    %v551 = vrot.slane %v523, 7
    %v552 = vsel %vm169, %v550, %v551
    %v553 = vsel %vm169, %v549, %v550
    %v554 = vsel %vm169, %v548, %v549
    %v555 = vsel %vm169, %v551, %v548
    %v556 = vmul.f32 %v555, %v194
    %v557 = vmul.f32 %v554, %v195
    %v558 = vmul.f32 %v553, %v196
    %v559 = vmul.f32 %v552, %v197
    %v560 = vrot.slane %v520, 1
    %v561 = vrot.slane %v521, 1
    %v562 = vrot.slane %v522, 1
    %v563 = vrot.slane %v523, 1
    %v564 = vsel %vm206, %v562, %v563
    %v565 = vsel %vm206, %v561, %v562
    %v566 = vsel %vm206, %v560, %v561
    %v567 = vsel %vm206, %v563, %v560
    %v568 = vmul.f32 %v566, %v231
    %v569 = vmul.f32 %v565, %v232
    %v570 = vmul.f32 %v564, %v233
    %v571 = vmul.f32 %v567, %v234
    %v572 = vrot.slane %v520, 2
    %v573 = vrot.slane %v521, 2
    %v574 = vrot.slane %v522, 2
    %v575 = vrot.slane %v523, 2
    %v576 = vsel %vm243, %v574, %v575
    %v577 = vsel %vm243, %v573, %v574
    %v578 = vsel %vm243, %v572, %v573
    %v579 = vsel %vm243, %v575, %v572
    %v580 = vmul.f32 %v578, %v268
    %v581 = vmul.f32 %v577, %v269
    %v582 = vmul.f32 %v576, %v270
    %v583 = vmul.f32 %v579, %v271
    %v584 = vrot.slane %v520, 3
    %v585 = vrot.slane %v521, 3
    %v586 = vrot.slane %v522, 3
    %v587 = vrot.slane %v523, 3
    %v588 = vsel %vm280, %v586, %v587
    %v589 = vsel %vm280, %v585, %v586
    %v590 = vsel %vm280, %v584, %v585
    %v591 = vsel %vm280, %v587, %v584
    %v592 = vmul.f32 %v590, %v305
    %v593 = vmul.f32 %v589, %v306
    %v594 = vmul.f32 %v588, %v307
    %v595 = vmul.f32 %v591, %v308
    %596 = vrot.lane.b32.xlu0 %v544, 40
    %v597 = vpop.permute.xlu0 %596
    %598 = vrot.lane.b32.xlu0 %v545, 40
    %v599 = vpop.permute.xlu0 %598
    %600 = vrot.lane.b32.xlu0 %v546, 40
    %v601 = vpop.permute.xlu0 %600
    %602 = vrot.lane.b32.xlu0 %v547, 40
    %v603 = vpop.permute.xlu0 %602
    %v604 = vadd.f32 %v532, %v597
    %v605 = vadd.f32 %v533, %v599
    %v606 = vadd.f32 %v534, %v601
    %v607 = vadd.f32 %v535, %v603
    %608 = vrot.lane.b32.xlu0 %v556, 80
    %v609 = vpop.permute.xlu0 %608
    %610 = vrot.lane.b32.xlu0 %v557, 80
    %v611 = vpop.permute.xlu0 %610
    %612 = vrot.lane.b32.xlu0 %v558, 80
    %v613 = vpop.permute.xlu0 %612
    %614 = vrot.lane.b32.xlu0 %v559, 80
    %v615 = vpop.permute.xlu0 %614
    %v616 = vadd.f32 %v604, %v609
    %v617 = vadd.f32 %v605, %v611
    %v618 = vadd.f32 %v606, %v613
    %v619 = vadd.f32 %v607, %v615
    %620 = vrot.lane.b32.xlu0 %v568, 40
    %v621 = vpop.permute.xlu0 %620
    %622 = vrot.lane.b32.xlu0 %v569, 40
    %v623 = vpop.permute.xlu0 %622
    %624 = vrot.lane.b32.xlu0 %v570, 40
    %v625 = vpop.permute.xlu0 %624
    %626 = vrot.lane.b32.xlu0 %v571, 40
    %v627 = vpop.permute.xlu0 %626
    %v628 = vadd.f32 %v520, %v621
    %v629 = vadd.f32 %v521, %v623
    %v630 = vadd.f32 %v522, %v625
    %v631 = vadd.f32 %v523, %v627
    %632 = vrot.lane.b32.xlu0 %v580, 80
    %v633 = vpop.permute.xlu0 %632
    %634 = vrot.lane.b32.xlu0 %v581, 80
    %v635 = vpop.permute.xlu0 %634
    %636 = vrot.lane.b32.xlu0 %v582, 80
    %v637 = vpop.permute.xlu0 %636
    %638 = vrot.lane.b32.xlu0 %v583, 80
    %v639 = vpop.permute.xlu0 %638
    %v640 = vadd.f32 %v628, %v633
    %v641 = vadd.f32 %v629, %v635
    %v642 = vadd.f32 %v630, %v637
    %v643 = vadd.f32 %v631, %v639
    %v644 = vpack.c.bf16 %v617, %v616
    %v645 = vpack.c.bf16 %v641, %v640
    %v646 = vpack.c.bf16 %v593, %v592
    %v647 = vpack.c.bf16 %v619, %v618
    %v648 = vpack.c.bf16 %v643, %v642
    %v649 = vpack.c.bf16 %v595, %v594
    %v650 = vld [vmem:[#allocation2] sm:$0xf]
    %v651 = vld [vmem:[#allocation2 + $0x4] sm:$0xf]
    %v652 = vld [vmem:[#allocation2 + $0x8] sm:$0xf]
    %v653 = vld [vmem:[#allocation2 + $0xc] sm:$0xf]
    %v654 = vld [vmem:[#allocation2 + $0x10] sm:$0xf]
    %v655 = vld [vmem:[#allocation2 + $0x14] sm:$0xf]
    %v656 = vld [vmem:[#allocation2 + $0x18] sm:$0xf]
    %v657 = vld [vmem:[#allocation2 + $0x1c] sm:$0xf]
    %v658 = vld [vmem:[#allocation2 + $0x20] sm:$0xf]
    %v659 = vld [vmem:[#allocation2 + $0x24] sm:$0xf]
    %v660 = vld [vmem:[#allocation2 + $0x28] sm:$0xf]
    %v661 = vld [vmem:[#allocation2 + $0x2c] sm:$0xf]
    %v662 = vld [vmem:[#allocation2 + $0x30] sm:$0xf]
    %v663 = vld [vmem:[#allocation2 + $0x34] sm:$0xf]
    %v664 = vld [vmem:[#allocation2 + $0x38] sm:$0xf]
    %v665 = vld [vmem:[#allocation2 + $0x3c] sm:$0xf]
    %v666 = vld [vmem:[#allocation2 + $0x40] sm:$0xf]
    %v667 = vld [vmem:[#allocation2 + $0x44] sm:$0xf]
    %v668 = vld [vmem:[#allocation2 + $0x48] sm:$0xf]
    %v669 = vld [vmem:[#allocation2 + $0x4c] sm:$0xf]
    %v670 = vld [vmem:[#allocation2 + $0x50] sm:$0xf]
    %v671 = vld [vmem:[#allocation2 + $0x54] sm:$0xf]
    %v672 = vld [vmem:[#allocation2 + $0x58] sm:$0xf]
    %v673 = vld [vmem:[#allocation2 + $0x5c] sm:$0xf]
    %v674 = vld [vmem:[#allocation2 + $0x60] sm:$0xf]
    %v675 = vld [vmem:[#allocation2 + $0x64] sm:$0xf]
    %v676 = vld [vmem:[#allocation2 + $0x68] sm:$0xf]
    %v677 = vld [vmem:[#allocation2 + $0x6c] sm:$0xf]
    %v678 = vld [vmem:[#allocation2 + $0x70] sm:$0xf]
    %v679 = vld [vmem:[#allocation2 + $0x74] sm:$0xf]
    %v680 = vld [vmem:[#allocation2 + $0x78] sm:$0xf]
    %v681 = vld [vmem:[#allocation2 + $0x7c] sm:$0xf]
    %v682 = vld [vmem:[#allocation2 + $0x80] sm:$0xf]
    %v683 = vld [vmem:[#allocation2 + $0x84] sm:$0xf]
    %v684 = vld [vmem:[#allocation2 + $0x88] sm:$0xf]
    %v685 = vld [vmem:[#allocation2 + $0x8c] sm:$0xf]
    %v686 = vld [vmem:[#allocation2 + $0x90] sm:$0xf]
    %v687 = vld [vmem:[#allocation2 + $0x94] sm:$0xf]
    %v688 = vld [vmem:[#allocation2 + $0x98] sm:$0xf]
    %v689 = vld [vmem:[#allocation2 + $0x9c] sm:$0xf]
    %v690 = vld [vmem:[#allocation2 + $0xa0] sm:$0xf]
    %v691 = vld [vmem:[#allocation2 + $0xa4] sm:$0xf]
    %v692 = vld [vmem:[#allocation2 + $0xa8] sm:$0xf]
    %v693 = vld [vmem:[#allocation2 + $0xac] sm:$0xf]
    %v694 = vld [vmem:[#allocation2 + $0xb0] sm:$0xf]
    %v695 = vld [vmem:[#allocation2 + $0xb4] sm:$0xf]
    %v696 = vld [vmem:[#allocation2 + $0xb8] sm:$0xf]
    %v697 = vld [vmem:[#allocation2 + $0xbc] sm:$0xf]
    %v746 = vunpack.c.l.b16 %v650
    %v747 = vunpack.c.l.b16 %v651
    %v748 = vunpack.c.l.b16 %v652
    %v749 = vunpack.c.l.b16 %v653
    %v750 = vunpack.c.l.b16 %v654
    %v751 = vunpack.c.l.b16 %v655
    %v752 = vunpack.c.l.b16 %v656
    %v753 = vunpack.c.l.b16 %v657
    %v754 = vunpack.c.l.b16 %v658
    %v755 = vunpack.c.l.b16 %v659
    %v756 = vunpack.c.l.b16 %v660
    %v757 = vunpack.c.l.b16 %v661
    %v758 = vunpack.c.l.b16 %v662
    %v759 = vunpack.c.l.b16 %v663
    %v760 = vunpack.c.l.b16 %v664
    %v761 = vunpack.c.l.b16 %v665
    %v762 = vunpack.c.l.b16 %v666
    %v763 = vunpack.c.l.b16 %v667
    %v764 = vunpack.c.l.b16 %v668
    %v765 = vunpack.c.l.b16 %v669
    %v766 = vunpack.c.l.b16 %v670
    %v767 = vunpack.c.l.b16 %v671
    %v768 = vunpack.c.l.b16 %v672
    %v769 = vunpack.c.l.b16 %v673
    %v770 = vunpack.c.l.b16 %v674
    %v771 = vunpack.c.l.b16 %v675
    %v772 = vunpack.c.l.b16 %v676
    %v773 = vunpack.c.l.b16 %v677
    %v774 = vunpack.c.l.b16 %v678
    %v775 = vunpack.c.l.b16 %v679
    %v776 = vunpack.c.l.b16 %v680
    %v777 = vunpack.c.l.b16 %v681
    %v778 = vunpack.c.l.b16 %v682
    %v779 = vunpack.c.l.b16 %v683
    %v780 = vunpack.c.l.b16 %v684
    %v781 = vunpack.c.l.b16 %v685
    %v782 = vunpack.c.l.b16 %v686
    %v783 = vunpack.c.l.b16 %v687
    %v784 = vunpack.c.l.b16 %v688
    %v785 = vunpack.c.l.b16 %v689
    %v786 = vunpack.c.l.b16 %v690
    %v787 = vunpack.c.l.b16 %v691
    %v788 = vunpack.c.l.b16 %v692
    %v789 = vunpack.c.l.b16 %v693
    %v790 = vunpack.c.l.b16 %v694
    %v791 = vunpack.c.l.b16 %v695
    %v792 = vunpack.c.l.b16 %v696
    %v793 = vunpack.c.l.b16 %v697
    %v794 = vpack.c.b16 %v747, %v746
    %v795 = vpack.c.b16 %v749, %v748
    %v796 = vpack.c.b16 %v751, %v750
    %v797 = vpack.c.b16 %v753, %v752
    %v798 = vpack.c.b16 %v755, %v754
    %v799 = vpack.c.b16 %v757, %v756
    %v800 = vpack.c.b16 %v759, %v758
    %v801 = vpack.c.b16 %v761, %v760
    %v802 = vpack.c.b16 %v763, %v762
    %v803 = vpack.c.b16 %v765, %v764
    %v804 = vpack.c.b16 %v767, %v766
    %v805 = vpack.c.b16 %v769, %v768
    %v806 = vpack.c.b16 %v771, %v770
    %v807 = vpack.c.b16 %v773, %v772
    %v808 = vpack.c.b16 %v775, %v774
    %v809 = vpack.c.b16 %v777, %v776
    %v810 = vpack.c.b16 %v779, %v778
    %v811 = vpack.c.b16 %v781, %v780
    %v812 = vpack.c.b16 %v783, %v782
    %v813 = vpack.c.b16 %v785, %v784
    %v814 = vpack.c.b16 %v787, %v786
    %v815 = vpack.c.b16 %v789, %v788
    %v816 = vpack.c.b16 %v791, %v790
    %v817 = vpack.c.b16 %v793, %v792
    %842 = vmatpush.bf16.msra.mxu0 %v801
    %843 = vmatpush.bf16.msra.mxu0 %v800
    %844 = vmatpush.bf16.msra.mxu0 %v799
    %845 = vmatpush.bf16.msra.mxu0 %v798
    %846 = vmatpush.bf16.msra.mxu0 %v797
    %847 = vmatpush.bf16.msra.mxu0 %v796
    %848 = vmatpush.bf16.msra.mxu0 %v795
    %849 = vmatpush.bf16.msra.mxu0 %v794
    %850 = vmatmul.bf16.gmra.mxu0 %v644
    %v851 = vpop.f32.mrf.mxu0
    %v852 = vadd.f32 0.0, %v851
    %v853 = vpop.f32.mrf.mxu0
    %v854 = vadd.f32 0.0, %v853
    %855 = vmatmul.bf16.gmra.mxu0 %v647
    %v856 = vpop.f32.mrf.mxu0
    %v857 = vadd.f32 0.0, %v856
    %v858 = vpop.f32.mrf.mxu0
    %v859 = vadd.f32 0.0, %v858
    %860 = vdwg.mxu0
    %861 = vmatpush.bf16.msra.mxu0 %v809
    %862 = vmatpush.bf16.msra.mxu0 %v808
    %863 = vmatpush.bf16.msra.mxu0 %v807
    %864 = vmatpush.bf16.msra.mxu0 %v806
    %865 = vmatpush.bf16.msra.mxu0 %v805
    %866 = vmatpush.bf16.msra.mxu0 %v804
    %867 = vmatpush.bf16.msra.mxu0 %v803
    %868 = vmatpush.bf16.msra.mxu0 %v802
    %869 = vmatmul.bf16.gmra.mxu0 %v645
    %v870 = vpop.f32.mrf.mxu0
    %v871 = vadd.f32 %v852, %v870
    %v872 = vpop.f32.mrf.mxu0
    %v873 = vadd.f32 %v854, %v872
    %874 = vmatmul.bf16.gmra.mxu0 %v648
    %v875 = vpop.f32.mrf.mxu0
    %v876 = vadd.f32 %v857, %v875
    %v877 = vpop.f32.mrf.mxu0
    %v878 = vadd.f32 %v859, %v877
    %879 = vdwg.mxu0
    %880 = vmatpush.bf16.msra.mxu0 %v817
    %881 = vmatpush.bf16.msra.mxu0 %v816
    %882 = vmatpush.bf16.msra.mxu0 %v815
    %883 = vmatpush.bf16.msra.mxu0 %v814
    %884 = vmatpush.bf16.msra.mxu0 %v813
    %885 = vmatpush.bf16.msra.mxu0 %v812
    %886 = vmatpush.bf16.msra.mxu0 %v811
    %887 = vmatpush.bf16.msra.mxu0 %v810
    %888 = vmatmul.bf16.gmra.mxu0 %v646
    %v889 = vpop.f32.mrf.mxu0
    %v890 = vadd.f32 %v871, %v889
    %v891 = vpop.f32.mrf.mxu0
    %v892 = vadd.f32 %v873, %v891
    %893 = vmatmul.bf16.gmra.mxu0 %v649
    %v894 = vpop.f32.mrf.mxu0
    %v895 = vadd.f32 %v876, %v894
    %v896 = vpop.f32.mrf.mxu0
    %v897 = vadd.f32 %v878, %v896
    %898 = vdwg.mxu0
    %v899 = vadd.f32 %v890, %v892
    %v900 = vadd.f32 %v899, %v895
    %v901 = vadd.f32 %v900, %v897
    %v902 = vrot.slane %v901, 4
    %v903 = vadd.f32 %v901, %v902
    %v904 = vrot.slane %v903, 2
    %v905 = vadd.f32 %v903, %v904
    %v906 = vrot.slane %v905, 1
    %v907 = vadd.f32 %v905, %v906
    %v908 = vmul.f32 %v907, %v485
    %v909 = vsub.f32 %v890, %v908
    %v910 = vsub.f32 %v892, %v908
    %v911 = vsub.f32 %v895, %v908
    %v912 = vsub.f32 %v897, %v908
    %v913 = vmul.f32 %v909, %v909
    %v914 = vmul.f32 %v910, %v910
    %v915 = vmul.f32 %v911, %v911
    %v916 = vmul.f32 %v912, %v912
    %v917 = vadd.f32 %v913, %v914
    %v918 = vadd.f32 %v917, %v915
    %v919 = vadd.f32 %v918, %v916
    %v920 = vrot.slane %v919, 4
    %v921 = vadd.f32 %v919, %v920
    %v922 = vrot.slane %v921, 2
    %v923 = vadd.f32 %v921, %v922
    %v924 = vrot.slane %v923, 1
    %v925 = vadd.f32 %v923, %v924
    %v926 = vmul.f32 %v925, %v485
    %v927 = vadd.f32 %v926, 1e-05
    %v928 = vrsqrt.pop %v927
    %v929 = vmul.f32 %v928, %v927
    %v930 = vmul.f32 %v929, %v928
    %v931 = vmul.f32 0.5, %v930
    %v932 = vsub.f32 1.5, %v931
    %v933 = vmul.f32 %v928, %v932
    %vm934 = vweird.f32 %v927
    %vm935 = vweird.f32 %v928
    %vm936 = vmor %vm934, %vm935
    %v937 = vsel %vm936, %v928, %v933
    %v938 = vmul.f32 %v909, %v937
    %v939 = vmul.f32 %v910, %v937
    %v940 = vmul.f32 %v911, %v937
    %v941 = vmul.f32 %v912, %v937
    %v942 = vmax.f32 %v938, 0.0
    %v943 = vmax.f32 %v939, 0.0
    %v944 = vmax.f32 %v940, 0.0
    %v945 = vmax.f32 %v941, 0.0
    %v946 = vrot.slane %v942, 1
    %v947 = vrot.slane %v943, 1
    %v948 = vrot.slane %v944, 1
    %v949 = vrot.slane %v945, 1
    %v950 = vsel %vm206, %v948, %v949
    %v951 = vsel %vm206, %v947, %v948
    %v952 = vsel %vm206, %v946, %v947
    %v953 = vsel %vm206, %v949, %v946
    %v954 = vmul.f32 %v952, %v231
    %v955 = vmul.f32 %v951, %v232
    %v956 = vmul.f32 %v950, %v233
    %v957 = vmul.f32 %v953, %v234
    %958 = vrot.lane.b32.xlu0 %v954, 20
    %v959 = vpop.permute.xlu0 %958
    %960 = vrot.lane.b32.xlu0 %v955, 20
    %v961 = vpop.permute.xlu0 %960
    %962 = vrot.lane.b32.xlu0 %v956, 20
    %v963 = vpop.permute.xlu0 %962
    %964 = vrot.lane.b32.xlu0 %v957, 20
    %v965 = vpop.permute.xlu0 %964
    %v966 = vadd.f32 %v942, %v959
    %v967 = vadd.f32 %v943, %v961
    %v968 = vadd.f32 %v944, %v963
    %v969 = vadd.f32 %v945, %v965
    %v970 = vpack.c.bf16 %v967, %v966
    %v971 = vpack.c.bf16 %v969, %v968
    %v972 = vld [vmem:[%s3] sm:$0xf]
    %v973 = vld [vmem:[%s3 + $0x4] sm:$0xf]
    %v974 = vld [vmem:[%s3 + $0x8] sm:$0xf]
    %v975 = vld [vmem:[%s3 + $0xc] sm:$0xf]
    %v976 = vld [vmem:[%s3 + $0x10] sm:$0xf]
    %v977 = vld [vmem:[%s3 + $0x14] sm:$0xf]
    %v978 = vld [vmem:[%s3 + $0x18] sm:$0xf]
    %v979 = vld [vmem:[%s3 + $0x1c] sm:$0xf]
    %v980 = vld [vmem:[%s3 + $0x20] sm:$0xf]
    %v981 = vld [vmem:[%s3 + $0x24] sm:$0xf]
    %v982 = vld [vmem:[%s3 + $0x28] sm:$0xf]
    %v983 = vld [vmem:[%s3 + $0x2c] sm:$0xf]
    %v984 = vld [vmem:[%s3 + $0x30] sm:$0xf]
    %v985 = vld [vmem:[%s3 + $0x34] sm:$0xf]
    %v986 = vld [vmem:[%s3 + $0x38] sm:$0xf]
    %v987 = vld [vmem:[%s3 + $0x3c] sm:$0xf]
    %v1004 = vunpack.c.l.b16 %v972
    %v1005 = vunpack.c.l.b16 %v973
    %v1006 = vunpack.c.l.b16 %v974
    %v1007 = vunpack.c.l.b16 %v975
    %v1008 = vunpack.c.l.b16 %v976
    %v1009 = vunpack.c.l.b16 %v977
    %v1010 = vunpack.c.l.b16 %v978
    %v1011 = vunpack.c.l.b16 %v979
    %v1012 = vunpack.c.l.b16 %v980
    %v1013 = vunpack.c.l.b16 %v981
    %v1014 = vunpack.c.l.b16 %v982
    %v1015 = vunpack.c.l.b16 %v983
    %v1016 = vunpack.c.l.b16 %v984
    %v1017 = vunpack.c.l.b16 %v985
    %v1018 = vunpack.c.l.b16 %v986
    %v1019 = vunpack.c.l.b16 %v987
    %v1020 = vpack.c.b16 %v1005, %v1004
    %v1021 = vpack.c.b16 %v1007, %v1006
    %v1022 = vpack.c.b16 %v1009, %v1008
    %v1023 = vpack.c.b16 %v1011, %v1010
    %v1024 = vpack.c.b16 %v1013, %v1012
    %v1025 = vpack.c.b16 %v1015, %v1014
    %v1026 = vpack.c.b16 %v1017, %v1016
    %v1027 = vpack.c.b16 %v1019, %v1018
    %1036 = vmatpush.bf16.msra.mxu0 %v1027
    %1037 = vmatpush.bf16.msra.mxu0 %v1026
    %1038 = vmatpush.bf16.msra.mxu0 %v1025
    %1039 = vmatpush.bf16.msra.mxu0 %v1024
    %1040 = vmatpush.bf16.msra.mxu0 %v1023
    %1041 = vmatpush.bf16.msra.mxu0 %v1022
    %1042 = vmatpush.bf16.msra.mxu0 %v1021
    %1043 = vmatpush.bf16.msra.mxu0 %v1020
    %1044 = vmatmul.bf16.gmra.mxu0 %v970
    %v1045 = vpop.f32.mrf.mxu0
    %v1046 = vadd.f32 0.0, %v1045
    %v1047 = vpop.f32.mrf.mxu0
    %v1048 = vadd.f32 0.0, %v1047
    %1049 = vmatmul.bf16.gmra.mxu0 %v971
    %v1050 = vpop.f32.mrf.mxu0
    %v1051 = vadd.f32 0.0, %v1050
    %v1052 = vpop.f32.mrf.mxu0
    %v1053 = vadd.f32 0.0, %v1052
    %1054 = vdwg.mxu0
    %v1055 = vadd.f32 %v1046, %v1048
    %v1056 = vadd.f32 %v1055, %v1051
    %v1057 = vadd.f32 %v1056, %v1053
    %v1058 = vrot.slane %v1057, 4
    %v1059 = vadd.f32 %v1057, %v1058
    %v1060 = vrot.slane %v1059, 2
    %v1061 = vadd.f32 %v1059, %v1060
    %v1062 = vrot.slane %v1061, 1
    %v1063 = vadd.f32 %v1061, %v1062
    %v1064 = vmul.f32 %v1063, %v485
    %v1065 = vsub.f32 %v1046, %v1064
    %v1066 = vsub.f32 %v1048, %v1064
    %v1067 = vsub.f32 %v1051, %v1064
    %v1068 = vsub.f32 %v1053, %v1064
    %v1069 = vmul.f32 %v1065, %v1065
    %v1070 = vmul.f32 %v1066, %v1066
    %v1071 = vmul.f32 %v1067, %v1067
    %v1072 = vmul.f32 %v1068, %v1068
    %v1073 = vadd.f32 %v1069, %v1070
    %v1074 = vadd.f32 %v1073, %v1071
    %v1075 = vadd.f32 %v1074, %v1072
    %v1076 = vrot.slane %v1075, 4
    %v1077 = vadd.f32 %v1075, %v1076
    %v1078 = vrot.slane %v1077, 2
    %v1079 = vadd.f32 %v1077, %v1078
    %v1080 = vrot.slane %v1079, 1
    %v1081 = vadd.f32 %v1079, %v1080
    %v1082 = vmul.f32 %v1081, %v485
    %v1083 = vadd.f32 %v1082, 1e-05
    %v1084 = vrsqrt.pop %v1083
    %v1085 = vmul.f32 %v1084, %v1083
    %v1086 = vmul.f32 %v1085, %v1084
    %v1087 = vmul.f32 0.5, %v1086
    %v1088 = vsub.f32 1.5, %v1087
    %v1089 = vmul.f32 %v1084, %v1088
    %vm1090 = vweird.f32 %v1083
    %vm1091 = vweird.f32 %v1084
    %vm1092 = vmor %vm1090, %vm1091
    %v1093 = vsel %vm1092, %v1084, %v1089
    %v1094 = vmul.f32 %v1065, %v1093
    %v1095 = vmul.f32 %v1066, %v1093
    %v1096 = vmul.f32 %v1067, %v1093
    %v1097 = vmul.f32 %v1068, %v1093
    %v1098 = vmax.f32 %v1094, 0.0
    %v1099 = vmax.f32 %v1095, 0.0
    %v1100 = vmax.f32 %v1096, 0.0
    %v1101 = vmax.f32 %v1097, 0.0
    %v1102 = vadd.f32 %v1098, %v1099
    %v1103 = vrot.slane %v1102, 4
    %v1104 = vadd.f32 %v1102, %v1103
    %v1105 = vrot.slane %v1104, 2
    %v1106 = vadd.f32 %v1104, %v1105
    %v1107 = vrot.slane %v1106, 1
    %v1108 = vadd.f32 %v1106, %v1107
    %v1109 = vadd.f32 %v1100, %v1101
    %v1110 = vrot.slane %v1109, 4
    %v1111 = vadd.f32 %v1109, %v1110
    %v1112 = vrot.slane %v1111, 2
    %v1113 = vadd.f32 %v1111, %v1112
    %v1114 = vrot.slane %v1113, 1
    %v1115 = vadd.f32 %v1113, %v1114
    %v1116 = vmul.f32 %v1108, 0.0625
    %v1117 = vmul.f32 %v1115, 0.0625
    %vm1120 = vcmask 1041409
    %v1121 = vsel %vm1120, %v1117, %v1116
    %1123 = vst [vmem:[#allocation5] sm:$0x3] %v1121
    // Predicated region
    $region22: #{_fwd.1} parent=1 // pred_check
      _
    $region23: #{_fwd.1} parent=1 // pred_check_branch
      %1125 = sbr.rel (0) target = $region25
    $region24: #{_fwd.1} parent=1 // pred_region
      %1127 = vsyncadd [#allocation4], 0
      %s1129 = sshll.u32 [#allocation5], 4
      %s1130 = int_to_ptr.vmem [resolvable:$true] %s1129
      %s1131 = sshll.u32 %s4, 4
      %s1132 = int_to_ptr.hbm [resolvable:$true] %s1131
      %1134 = dma.vmem_to_hbm [thread:$0]  %s1130, 32, %s1132, [#allocation4]
    $region25: #{_fwd.1} parent=1 // pred_fallthru
      _
    // Predicated region
    $region26: #{_fwd.1} parent=1 // pred_check
      _
    $region27: #{_fwd.1} parent=1 // pred_check_branch
      %1136 = sbr.rel (0) target = $region29
    $region28: #{_fwd.1} parent=1 // pred_region
      %1138 = dma.done [#allocation4], 32
    $region29: #{_fwd.1} parent=1 // pred_fallthru
      _
    %1139 = vsyncpa [#allocation3], 1
    %1140 = vsyncpa [#allocation4], 1

</llo_original>
